<compile_context>
chip_gen: v7x
topology: tpu7x:2x2x1
jax: 0.10.0
libtpu: 0.0.40
codegen_flags: <defaults>
</compile_context>

<pallas_src>
import functools
import math

import jax
import jax.numpy as jnp
from jax.experimental import pallas as pl
from jax.experimental.pallas import tpu as pltpu


_VMEM_BUDGET_BYTES = 48 * 1024 * 1024   # fits v7x (64 MiB phys) with headroom;
                                        # well under v5e/v6e 128 MiB physical.


def _round_up(x, m):
    return ((x + m - 1) // m) * m


def _eql_kernel(x_ref, w_ref, b_ref, o_ref, *, g, out_unary, out_binary):
    x = x_ref[...]                      # (TILE_B, in_features)
    w = w_ref[...]                      # (in_features, total_units)  [permuted]
    b = b_ref[...]                      # (1, total_units)            [permuted]

    # Linear layer on the MXU, f32 accumulation.
    z = jnp.dot(x, w, preferred_element_type=jnp.float32) + b

    parts = []

    # ---- Unary units: identity / sin / cos via a single sin ---------------
    # Columns [0, g) -> identity, [g, 2g) -> sin(x), [2g, 3g) -> cos(x) =
    # sin(x + pi/2).  One transcendental over the slab + column-mask select.
    if out_unary > 0:
        zu = z[:, :out_unary]
        col = jax.lax.broadcasted_iota(jnp.int32, zu.shape, dimension=1)
        half_pi = jnp.float32(math.pi / 2)
        phase = jnp.where(col < 2 * g, jnp.float32(0.0), half_pi)
        trig = jnp.sin(zu + phase)
        parts.append(jnp.where(col < g, zu, trig))

    # ---- Binary units ------------------------------------------------------
    # prepare_eql_params permuted pair members so the two members of each pair
    # live in two contiguous halves -> pairwise product is a plain elementwise
    # multiply (no strided gather).
    if out_binary > 0:
        left = z[:, out_unary:out_unary + out_binary]
        right = z[:, out_unary + out_binary:out_unary + 2 * out_binary]
        parts.append(left * right)

    # Single full-width store (one unmasked vst pass over the output tile).
    out = parts[0] if len(parts) == 1 else jnp.concatenate(parts, axis=1)
    o_ref[...] = out.astype(o_ref.dtype)


def prepare_eql_params(weight, bias, *, out_unary, out_binary):
    """One-time parameter prep (hoisted out of the per-call path).

    weight: (total_units, in_features) as in nn.Linear;  bias: (total_units,).
    Returns (w_perm, b_perm) with columns ordered
    [unary..., even pair members..., odd pair members...] and weight transposed
    to (in_features, total_units) so the kernel does a single x @ W matmul.
    """
    total_units = out_unary + 2 * out_binary
    assert weight.shape[0] == total_units
    even_idx = out_unary + 2 * jnp.arange(out_binary)
    odd_idx = even_idx + 1
    perm = jnp.concatenate(
        [jnp.arange(out_unary), even_idx, odd_idx]
    ) if out_binary > 0 else jnp.arange(out_unary)
    w_perm = weight[perm, :].T                       # (in_features, total_units)
    b_perm = bias[perm].reshape(1, total_units)      # (1, total_units)
    return w_perm, b_perm


def _choose_tile_b(B, tile_b, in_features, out_dim, total_units, x_itemsize,
                   w_itemsize):
    """Pick a batch tile: as big as VMEM allows, but keep grid steps for v7x."""
    tb = min(tile_b, _round_up(B, 8))

    # Keep >= ~8 grid steps on large batches so ("parallel",) can shard across
    # v7x's two TensorCores; never shrink below 512 rows per tile.
    if B >= 2 * 512:
        tb = min(tb, max(512, _round_up(pl.cdiv(B, 8), 8)))

    # VMEM budget: double-buffered x/out tiles + (double-buffered) resident
    # W/b + generous allowance for in-kernel f32 temporaries (z, trig, ...).
    resident = 2 * (in_features * total_units + total_units) * w_itemsize
    per_row = 2 * (in_features + out_dim) * x_itemsize + 6 * total_units * 4
    avail = _VMEM_BUDGET_BYTES - resident - (2 << 20)
    if per_row > 0 and avail > 0:
        tb = min(tb, max(8, (avail // per_row) // 8 * 8))

    return max(tb, 8)


def eql_layer_apply(x, w_perm, b_perm, *, out_unary, out_binary, tile_b=1024):
    """x: (B, in_features); w_perm: (in_features, total_units); b_perm: (1, total_units).

    x / w_perm may be bf16 on v6e/v7x to halve HBM traffic; accumulation and
    all post-matmul math stay f32, only the final store is cast to x.dtype.
    """
    B, in_features = x.shape
    total_units = out_unary + 2 * out_binary
    assert w_perm.shape == (in_features, total_units)
    assert out_unary % 3 == 0
    g = out_unary // 3
    out_dim = out_unary + out_binary

    if out_dim == 0:
        return jnp.zeros((B, 0), dtype=x.dtype)

    tb = _choose_tile_b(
        B, tile_b, in_features, out_dim, total_units,
        jnp.dtype(x.dtype).itemsize, jnp.dtype(w_perm.dtype).itemsize,
    )
    grid = (pl.cdiv(B, tb),)

    kernel = functools.partial(
        _eql_kernel, g=g, out_unary=out_unary, out_binary=out_binary
    )

    cost = pl.CostEstimate(
        flops=2 * B * in_features * total_units + 2 * B * out_dim,
        transcendentals=B * 2 * g,
        bytes_accessed=jnp.dtype(x.dtype).itemsize * (B * in_features + B * out_dim)
        + jnp.dtype(w_perm.dtype).itemsize * (in_features * total_units + total_units),
    )

    return pl.pallas_call(
        kernel,
        out_shape=jax.ShapeDtypeStruct((B, out_dim), x.dtype),
        grid=grid,
        in_specs=[
            # x: tiled over batch, pipelined/double-buffered by Pallas.
            pl.BlockSpec((tb, in_features), lambda i: (i, 0)),
            # weight/bias: same block every step -> fetched once, VMEM-resident.
            pl.BlockSpec((in_features, total_units), lambda i: (0, 0)),
            pl.BlockSpec((1, total_units), lambda i: (0, 0)),
        ],
        out_specs=pl.BlockSpec((tb, out_dim), lambda i: (i, 0)),
        compiler_params=pltpu.CompilerParams(
            dimension_semantics=("parallel",),
            vmem_limit_bytes=_VMEM_BUDGET_BYTES,
        ),
        cost_estimate=cost,
    )(x, w_perm, b_perm)


def eql_layer(x, weight, bias, *, out_unary, out_binary, tile_b=1024):
    """Convenience wrapper: nn.Linear-layout params -> forward output."""
    w_perm, b_perm = prepare_eql_params(
        weight, bias, out_unary=out_unary, out_binary=out_binary
    )
    return eql_layer_apply(
        x, w_perm, b_perm, out_unary=out_unary, out_binary=out_binary, tile_b=tile_b
    )


def eql_layer_ref(x, weight, bias, *, out_unary, out_binary):
    """Pure-JAX reference mirroring the PyTorch forward exactly."""
    z = x @ weight.T + bias
    g = out_unary // 3
    id_part = z[:, :g]
    sin_part = jnp.sin(z[:, g:2 * g])
    cos_part = jnp.cos(z[:, 2 * g:3 * g])
    unary_out = jnp.concatenate([id_part, sin_part, cos_part], axis=1)
    binary_inputs = z[:, out_unary:].reshape(-1, out_binary, 2)
    binary_out = jnp.prod(binary_inputs, axis=2)
    return jnp.concatenate([unary_out, binary_out], axis=1)


if __name__ == "__main__":
    # Small shapes consistent with the module.
    B = 8
    in_features = 32
    out_unary = 12          # divisible by 3
    out_binary = 8
    total_units = out_unary + 2 * out_binary

    key = jax.random.PRNGKey(0)
    kx, kw, kb = jax.random.split(key, 3)

    x = jax.random.normal(kx, (B, in_features), dtype=jnp.float32)
    # Deterministic "nn.Linear"-style init (uniform in +-1/sqrt(in_features)).
    bound = 1.0 / (in_features ** 0.5)
    weight = jax.random.uniform(
        kw, (total_units, in_features), minval=-bound, maxval=bound, dtype=jnp.float32
    )
    bias = jax.random.uniform(
        kb, (total_units,), minval=-bound, maxval=bound, dtype=jnp.float32
    )

    # Hoist the parameter permutation/transpose out of the per-call path.
    w_perm, b_perm = prepare_eql_params(
        weight, bias, out_unary=out_unary, out_binary=out_binary
    )
    apply_fn = jax.jit(
        functools.partial(eql_layer_apply, out_unary=out_unary, out_binary=out_binary)
    )

    out = apply_fn(x, w_perm, b_perm)
    out = jax.block_until_ready(out)

    ref = eql_layer_ref(x, weight, bias, out_unary=out_unary, out_binary=out_binary)
    assert out.shape == (B, out_unary + out_binary)
    assert jnp.allclose(out, ref, atol=1e-5, rtol=1e-5), "mismatch vs reference"

    print("KERNEL_OK")
</pallas_src>

<mosaic_0001>
module attributes {stable_mosaic.version = 11 : i64} {
  func.func @_eql_kernel(%arg0: i32, %arg1: memref<8x32xf32, #tpu.memory_space<vmem>>, %arg2: memref<32x28xf32, #tpu.memory_space<vmem>>, %arg3: memref<1x28xf32, #tpu.memory_space<vmem>>, %arg4: memref<8x20xf32, #tpu.memory_space<vmem>>) attributes {dimension_semantics = [#tpu.dimension_semantics<parallel>], iteration_bounds = array<i64: 1>, scalar_prefetch = 0 : i64, scratch_operands = 0 : i64, tpu.core_type = #tpu.core_type<tc>, window_params = [{transform_indices = @transform_0, window_bounds = array<i64: 8, 32>}, {pipeline_mode = #tpu.pipeline_mode<synchronous>, transform_indices = @transform_1, window_bounds = array<i64: 32, 28>}, {pipeline_mode = #tpu.pipeline_mode<synchronous>, transform_indices = @transform_2, window_bounds = array<i64: 1, 28>}, {transform_indices = @transform_3, window_bounds = array<i64: 8, 20>}]} {
    %c0 = arith.constant 0 : index
    %c0_0 = arith.constant 0 : index
    %0 = vector.load %arg1[%c0, %c0_0] : memref<8x32xf32, #tpu.memory_space<vmem>>, vector<8x32xf32>
    %c0_1 = arith.constant 0 : index
    %c0_2 = arith.constant 0 : index
    %1 = vector.load %arg2[%c0_1, %c0_2] : memref<32x28xf32, #tpu.memory_space<vmem>>, vector<32x28xf32>
    %c0_3 = arith.constant 0 : index
    %c0_4 = arith.constant 0 : index
    %2 = vector.load %arg3[%c0_3, %c0_4] : memref<1x28xf32, #tpu.memory_space<vmem>>, vector<1x28xf32>
    %cst = arith.constant dense<0.000000e+00> : vector<8x28xf32>
    %3 = tpu.matmul %0, %1, %cst {dimension_numbers = #tpu.dot_dimension_numbers<[1], [0], [0], [1], [0, 0, 1, 1], [], []>} : vector<8x32xf32>, vector<32x28xf32>, vector<8x28xf32> -> vector<8x28xf32>
    %4 = vector.broadcast %2 : vector<1x28xf32> to vector<8x28xf32>
    %5 = arith.addf %3, %4 : vector<8x28xf32>
    %6 = vector.extract_strided_slice %5 {offsets = [0, 0], sizes = [8, 12], strides = [1, 1]} : vector<8x28xf32> to vector<8x12xf32>
    %7 = tpu.iota {dimensions = array<i32: 1>} : vector<8x12xi32>
    %c8_i32 = arith.constant 8 : i32
    %8 = vector.broadcast %c8_i32 : i32 to vector<8x12xi32>
    %9 = arith.cmpi slt, %7, %8 : vector<8x12xi32>
    %cst_5 = arith.constant 0.000000e+00 : f32
    %cst_6 = arith.constant 1.57079637 : f32
    %10 = vector.broadcast %cst_5 : f32 to vector<8x12xf32>
    %11 = vector.broadcast %cst_6 : f32 to vector<8x12xf32>
    %12 = arith.select %9, %10, %11 : vector<8x12xi1>, vector<8x12xf32>
    %13 = arith.addf %6, %12 : vector<8x12xf32>
    %14 = math.sin %13 : vector<8x12xf32>
    %c4_i32 = arith.constant 4 : i32
    %15 = vector.broadcast %c4_i32 : i32 to vector<8x12xi32>
    %16 = arith.cmpi slt, %7, %15 : vector<8x12xi32>
    %17 = arith.select %16, %6, %14 : vector<8x12xi1>, vector<8x12xf32>
    %18 = vector.extract_strided_slice %5 {offsets = [0, 12], sizes = [8, 8], strides = [1, 1]} : vector<8x28xf32> to vector<8x8xf32>
    %19 = vector.extract_strided_slice %5 {offsets = [0, 20], sizes = [8, 8], strides = [1, 1]} : vector<8x28xf32> to vector<8x8xf32>
    %20 = arith.mulf %18, %19 : vector<8x8xf32>
    %21 = tpu.concatenate %17, %20 in 1 : vector<8x12xf32>, vector<8x8xf32> -> vector<8x20xf32>
    %c0_7 = arith.constant 0 : index
    %c0_8 = arith.constant 0 : index
    %22 = vector.load %arg4[%c0_7, %c0_8] : memref<8x20xf32, #tpu.memory_space<vmem>>, vector<8x20xf32>
    tpu.vector_store %arg4[%c0_7, %c0_8], %21 {strides = array<i32>} : memref<8x20xf32, #tpu.memory_space<vmem>>, vector<8x20xf32>,
    return
  }
  func.func @transform_0(%arg0: i32) -> (i32, i32) {
    %c0_i32 = arith.constant 0 : i32
    %c0_i32_0 = arith.constant 0 : i32
    return %arg0, %c0_i32 : i32, i32
  }
  func.func @transform_1(%arg0: i32) -> (i32, i32) {
    %c0_i32 = arith.constant 0 : i32
    %c0_i32_0 = arith.constant 0 : i32
    %c0_i32_1 = arith.constant 0 : i32
    return %c0_i32, %c0_i32_0 : i32, i32
  }
  func.func @transform_2(%arg0: i32) -> (i32, i32) {
    %c0_i32 = arith.constant 0 : i32
    %c0_i32_0 = arith.constant 0 : i32
    %c0_i32_1 = arith.constant 0 : i32
    return %c0_i32, %c0_i32_0 : i32, i32
  }
  func.func @transform_3(%arg0: i32) -> (i32, i32) {
    %c0_i32 = arith.constant 0 : i32
    %c0_i32_0 = arith.constant 0 : i32
    return %arg0, %c0_i32 : i32, i32
  }
}

</mosaic_0001>

<llo_original>
// kernel: eql_layer_apply.1
$region0: #{eql_layer_apply.1}
  #allocation0 [shape = 'u32[]', space=smem, size = 0x4, offset = 0x4, fixed_abs, tag = 'smem constant byte address 0x4 - core index']
  #allocation1 [shape = 'u32[144,128]{1,0:T(1,128)}', space=vmem, size = 0x12000, scoped, tag = 'internal scratch']
  %s0 = inlined_call_operand.hbm [shape: f32[8,32], index: 0, kind: input, shape index: {}]
  %s1 = inlined_call_operand.hbm [shape: f32[32,28], index: 1, kind: input, shape index: {}]
  %s2 = inlined_call_operand.vmem [shape: f32[1,28], index: 2, kind: input, shape index: {}]
  %s3 = inlined_call_operand.hbm [shape: f32[8,20], index: 3, kind: output, shape index: {}]
  %s4 = sld [smem:[#allocation0]]
  $region30: #{eql_layer_apply.1} parent=0
    _
  %s6 = ssub.s32 1, %s4
  %s7 = scalar_select 0, %s6, %s4
  $region1: #{eql_layer_apply.1} parent=0
    #allocation2 [shape = 'u8[4096]{0}', space=vmem, size = 0x1000, scoped, tag = 'input window, operand 0, single buffered']
    #allocation3 [shape = 's32[1]{0}', space=sflag, size = 0x4, scoped, tag = 'scoped memory for eql_layer_apply.1']
    #allocation4 [shape = 's32[1]{0}', space=sflag, size = 0x4, scoped, tag = 'scoped memory for eql_layer_apply.1']
    #allocation5 [shape = 'u8[16384]{0}', space=vmem, size = 0x4000, scoped, tag = 'input window, operand 1, single buffered']
    #allocation6 [shape = 's32[1]{0}', space=sflag, size = 0x4, scoped, tag = 'scoped memory for eql_layer_apply.1']
    #allocation7 [shape = 'u8[4096]{0}', space=vmem, size = 0x1000, scoped, tag = 'output window, operand 0, single buffered']
    %8 = vsyncpa [#allocation3], 0
    %9 = vsyncpa [#allocation6], 0
    %10 = vsyncpa [#allocation4], 0
    // Predicated region
    $region2: #{eql_layer_apply.1} parent=1 // pred_check
      _
    $region3: #{eql_layer_apply.1} parent=1 // pred_check_branch
      %12 = sbr.rel (0) target = $region5
    $region4: #{eql_layer_apply.1} parent=1 // pred_region
      %s14 = ssub.s32 128, 128
      %15 = vsyncadd [#allocation3], %s14
      %s17 = sshll.u32 [#allocation2], 4
      %s18 = int_to_ptr.vmem [resolvable:$true] %s17
      %20 = dma.hbm_to_vmem [thread:$0]  %s0, 128, %s18, [#allocation3]
    $region5: #{eql_layer_apply.1} parent=1 // pred_fallthru
      _
    // Predicated region
    $region6: #{eql_layer_apply.1} parent=1 // pred_check
      _
    $region7: #{eql_layer_apply.1} parent=1 // pred_check_branch
      %22 = sbr.rel (0) target = $region9
    $region8: #{eql_layer_apply.1} parent=1 // pred_region
      %s24 = ssub.s32 512, 512
      %25 = vsyncadd [#allocation6], %s24
      %s26 = sshll.u32 [#allocation5], 4
      %s27 = int_to_ptr.vmem [resolvable:$true] %s26
      %32 = dma.hbm_to_vmem [thread:$0]  %s1, 512, %s27, [#allocation6], 128, 128, 8
    $region9: #{eql_layer_apply.1} parent=1 // pred_fallthru
      _
    // Predicated region
    $region10: #{eql_layer_apply.1} parent=1 // pred_check
      _
    $region11: #{eql_layer_apply.1} parent=1 // pred_check_branch
      %34 = sbr.rel (0) target = $region13
    $region12: #{eql_layer_apply.1} parent=1 // pred_region
      _
    $region13: #{eql_layer_apply.1} parent=1 // pred_fallthru
      _
    // Predicated region
    $region14: #{eql_layer_apply.1} parent=1 // pred_check
      _
    $region15: #{eql_layer_apply.1} parent=1 // pred_check_branch
      %36 = sbr.rel (0) target = $region17
    $region16: #{eql_layer_apply.1} parent=1 // pred_region
      %37 = dma.done [#allocation3], 128
    $region17: #{eql_layer_apply.1} parent=1 // pred_fallthru
      _
    // Predicated region
    $region18: #{eql_layer_apply.1} parent=1 // pred_check
      _
    $region19: #{eql_layer_apply.1} parent=1 // pred_check_branch
      %39 = sbr.rel (0) target = $region21
    $region20: #{eql_layer_apply.1} parent=1 // pred_region
      %40 = dma.done [#allocation6], 512
    $region21: #{eql_layer_apply.1} parent=1 // pred_fallthru
      _
    %v41 = vld [vmem:[#allocation2] sm:$0xff]
    %v42 = vld [vmem:[#allocation5] sm:$0xff]
    %v43 = vld [vmem:[#allocation5 + $0x8] sm:$0xff]
    %v44 = vld [vmem:[#allocation5 + $0x10] sm:$0xff]
    %v45 = vld [vmem:[#allocation5 + $0x18] sm:$0xff]
    %v46 = vld [vmem:[%s2] sm:$0x1]
    %v48 = vlaneseq
    %v49 = vshrl.u32 %v48, 7
    %v50 = vsub.s32 0, %v49
    %v51 = vrot.slane %v46, %v50
    %vm53 = vcmask 261120
    %v55 = vsel %vm53, %v41, 0
    %57 = vmatprep.subr.mxu0 0.0
    %58 = vmatpush1.msra.mxu0 %v42
    %59 = vmatprep.subr.mxu0 0.0
    %60 = vmatpush1.msra.mxu0 %v43
    %61 = vmatprep.subr.mxu0 0.0
    %62 = vmatpush1.msra.mxu0 %v44
    %63 = vmatprep.subr.mxu0 0.0
    %64 = vmatpush1.msra.mxu0 %v45
    %65 = vmatprep.subr.mxu0 0.0
    %66 = vmatpush1.msra.mxu0 0.0
    %67 = vmatprep.subr.mxu0 0.0
    %68 = vmatpush1.msra.mxu0 0.0
    %69 = vmatprep.subr.mxu0 0.0
    %70 = vmatpush1.msra.mxu0 0.0
    %71 = vmatprep.subr.mxu0 0.0
    %72 = vmatpush1.msra.mxu0 0.0
    %73 = vmatprep.subr.mxu0 0.0
    %74 = vmatpush1.msra.mxu0 0.0
    %75 = vmatprep.subr.mxu0 0.0
    %76 = vmatpush1.msra.mxu0 0.0
    %77 = vmatprep.subr.mxu0 0.0
    %78 = vmatpush1.msra.mxu0 0.0
    %79 = vmatprep.subr.mxu0 0.0
    %80 = vmatpush1.msra.mxu0 0.0
    %81 = vmatprep.subr.mxu0 0.0
    %82 = vmatpush1.msra.mxu0 0.0
    %83 = vmatprep.subr.mxu0 0.0
    %84 = vmatpush1.msra.mxu0 0.0
    %85 = vmatprep.subr.mxu0 0.0
    %86 = vmatpush1.msra.mxu0 0.0
    %87 = vmatprep.subr.mxu0 0.0
    %88 = vmatpush1.msra.mxu0 0.0
    %89 = vmatprep.subr.mxu0 0.0
    %90 = vmatpush1.msra.mxu0 0.0
    %91 = vmatprep.subr.mxu0 0.0
    %92 = vmatpush1.msra.mxu0 0.0
    %93 = vmatprep.subr.mxu0 0.0
    %94 = vmatpush1.msra.mxu0 0.0
    %95 = vmatprep.subr.mxu0 0.0
    %96 = vmatpush1.msra.mxu0 0.0
    %97 = vmatprep.subr.mxu0 0.0
    %98 = vmatpush1.msra.mxu0 0.0
    %99 = vmatprep.subr.mxu0 0.0
    %100 = vmatpush1.msra.mxu0 0.0
    %101 = vmatprep.subr.mxu0 0.0
    %102 = vmatpush1.msra.mxu0 0.0
    %103 = vmatprep.subr.mxu0 0.0
    %104 = vmatpush1.msra.mxu0 0.0
    %105 = vmatprep.subr.mxu0 0.0
    %106 = vmatpush1.msra.mxu0 0.0
    %107 = vmatprep.subr.mxu0 0.0
    %108 = vmatpush1.msra.mxu0 0.0
    %109 = vmatprep.subr.mxu0 0.0
    %110 = vmatpush1.msra.mxu0 0.0
    %111 = vmatprep.subr.mxu0 0.0
    %112 = vmatpush1.msra.mxu0 0.0
    %113 = vmatprep.subr.mxu0 0.0
    %114 = vmatpush1.msra.mxu0 0.0
    %115 = vmatprep.subr.mxu0 0.0
    %116 = vmatpush1.msra.mxu0 0.0
    %117 = vmatprep.subr.mxu0 0.0
    %118 = vmatpush1.msra.mxu0 0.0
    %119 = vmatprep.subr.mxu0 0.0
    %120 = vmatpush1.msra.mxu0 0.0
    %121 = vmatprep.mubr.f32.mxu0 0.0
    %122 = vmatmul.mubr.f32.gmra.mrb[0].mxu0 %v55
    %v123 = vpop.f32.mrb[0].mxu0
    %v124 = vadd.f32 %v51, %v123
    %v125 = vpop.f32.mrb[0].mxu0
    %126 = vdwg.mxu0
    %v127 = vlaneseq
    %v128 = vand.u32 %v127, 127
    %vm129 = vcmp.lt.s32.totalorder %v128, 8
    %v130 = vsel %vm129, 0.0, 1.5707964
    %v131 = vadd.f32 %v124, %v130
    %v132 = vand.u32 2147483647, %v131
    %vm133 = vcmp.le.f32.partialorder %v132, 0.7853982
    %vm134 = vcmp.lt.s32.totalorder %v131, 0
    %v135 = vand.u32 %v131, 2139095040
    %v136 = vshrl.u32 %v135, 23
    %v137 = vsub.s32 %v136, 127
    %v138 = vand.u32 2147483647, %v131
    %v139 = vand.u32 %v138, 8388607
    %v140 = vor.u32 %v139, 8388608
    %v141 = vsub.s32 0, %v140
    %v142 = vadd.s32 %v137, 1
    %vm143 = vcmp.gt.s32.totalorder %v142, 0
    %v144 = vsel %vm143, %v142, 0
    %v145 = vshrl.u32 %v144, 5
    %v146 = vand.u32 %v144, 31
    %v147 = vsub.s32 32, %v146
    %v148 = vshrl.u32 683565275, %v147
    %v149 = vshll.u32 683565275, %v146
    %v150 = vshrl.u32 2475754826, %v147
    %v151 = vor.u32 %v149, %v150
    %v152 = vshll.u32 2475754826, %v146
    %v153 = vshrl.u32 2131351028, %v147
    %v154 = vor.u32 %v152, %v153
    %v155 = vshll.u32 2131351028, %v146
    %v156 = vshrl.u32 2102212464, %v147
    %v157 = vor.u32 %v155, %v156
    %v158 = vshll.u32 2102212464, %v146
    %v159 = vshrl.u32 920167782, %v147
    %v160 = vor.u32 %v158, %v159
    %v161 = vshll.u32 920167782, %v146
    %v162 = vshrl.u32 1326507024, %v147
    %v163 = vor.u32 %v161, %v162
    %vm164 = vcmp.lt.s32.totalorder %v145, 1
    %vm165 = vcmp.lt.s32.totalorder %v145, 2
    %vm166 = vcmp.lt.s32.totalorder %v145, 3
    %vm167 = vcmp.lt.s32.totalorder %v145, 4
    %v168 = vsel %vm164, %v148, %v151
    %v169 = vsel %vm167, %v157, 2102212464
    %v170 = vsel %vm166, %v154, %v169
    %v171 = vsel %vm165, %v168, %v170
    %v172 = vsel %vm164, %v151, %v154
    %v173 = vsel %vm167, %v160, 920167782
    %v174 = vsel %vm166, %v157, %v173
    %v175 = vsel %vm165, %v172, %v174
    %v176 = vsel %vm164, %v154, %v157
    %v177 = vsel %vm167, %v163, 1326507024
    %v178 = vsel %vm166, %v160, %v177
    %v179 = vsel %vm165, %v176, %v178
    %v180 = vshll.u32 %v140, 8
    %v181 = vmul.u32.u64.compose %v180, %v179
    %v182 = vextract.low.u32 %v181
    %v183 = vextract.high.u32 %v181
    %v184 = vmul.u32.u64.compose %v180, %v175
    %v185 = vextract.low.u32 %v184
    %v186 = vextract.high.u32 %v184
    %v187 = vmul.u32 %v180, %v171
    %v188 = vadd.s32 %v183, %v185
    %vm189 = vc.u32 %v183, %v185
    %v190 = vadd.s32 %v186, 1
    %v191 = vsel %vm189, %v190, %v186
    %v192 = vadd.s32 %v187, %v191
    %v193 = vadd.s32 %v192, 536870912
    %v194 = vshrl.u32 %v193, 30
    %v195 = vshll.u32 %v194, 30
    %v196 = vsub.s32 %v192, %v195
    %vm197 = vcmp.lt.s32.totalorder %v196, 0
    %v198 = vsub.s32 0, %v196
    %v199 = vsel %vm197, %v198, %v196
    %v200 = vclz %v199
    %v201 = vsub.s32 %v200, 2
    %vm202 = vcmp.gt.s32.totalorder 0, %v201
    %v203 = vsel %vm202, 0, %v201
    %v204 = vsub.s32 32, %v203
    %v205 = vshll.u32 %v196, %v203
    %v206 = vshrl.u32 %v188, %v204
    %v207 = vor.u32 %v205, %v206
    %v208 = vsub.s32 4294967266, %v203
    %v209 = vadd.s32 %v208, 127
    %v210 = vshll.u32 %v209, 23
    %v211 = vor.u32 4788187, %v210
    %v212 = vand.u32 2147483647, %v211
    %v214 = vcvt.s32.f32 %v207
    %v215 = vmul.f32 %v214, %v212
    %v216 = vxor.u32 %v215, 2147483648
    %v217 = vsel %vm134, %v216, %v215
    %v218 = vsub.s32 4, %v194
    %v219 = vsel %vm134, %v218, %v194
    %v220 = vsel %vm133, %v131, %v217
    %v221 = vsel %vm133, 0, %v219
    %v222 = vcosq.f32.pop %v220
    %v223 = vsinq.f32.pop %v220
    %vm224 = vweird.f32 %v131
    %v225 = vadd.s32 %v221, 3
    %v226 = vand.u32 %v225, 3
    %vm227 = vcmp.lt.s32.totalorder %v226, 2
    %vm228 = vcmp.eq.s32.totalorder %v226, 0
    %v229 = vxor.u32 %v223, 2147483648
    %v230 = vsel %vm228, %v222, %v229
    %vm231 = vcmp.eq.s32.totalorder %v226, 2
    %v232 = vxor.u32 %v222, 2147483648
    %v233 = vsel %vm231, %v232, %v223
    %v234 = vsel %vm227, %v230, %v233
    %v235 = vsel %vm224, nan, %v234
    %vm236 = vcmp.lt.s32.totalorder %v128, 4
    %v237 = vsel %vm236, %v124, %v235
    %239 = vrot.lane.b32.xlu0 %v124, 120
    %v240 = vpop.permute.xlu0 %239
    %v242 = vmul.f32 %v124, %v240
    %vm243 = vcmask 97280
    %v244 = vsel %vm243, %v237, %v242
    %vm245 = vcmask 162816
    %246 = vst.msk [vmem:[#allocation7] sm:$0xff] %vm245, %v244
    // Predicated region
    $region22: #{eql_layer_apply.1} parent=1 // pred_check
      _
    $region23: #{eql_layer_apply.1} parent=1 // pred_check_branch
      %248 = sbr.rel (0) target = $region25
    $region24: #{eql_layer_apply.1} parent=1 // pred_region
      %s250 = ssub.s32 128, 128
      %251 = vsyncadd [#allocation4], %s250
      %s253 = sshll.u32 [#allocation7], 4
      %s254 = int_to_ptr.vmem [resolvable:$true] %s253
      %256 = dma.vmem_to_hbm [thread:$0]  %s254, 128, %s3, [#allocation4]
    $region25: #{eql_layer_apply.1} parent=1 // pred_fallthru
      _
    // Predicated region
    $region26: #{eql_layer_apply.1} parent=1 // pred_check
      _
    $region27: #{eql_layer_apply.1} parent=1 // pred_check_branch
      %258 = sbr.rel (0) target = $region29
    $region28: #{eql_layer_apply.1} parent=1 // pred_region
      %259 = dma.done [#allocation4], 128
    $region29: #{eql_layer_apply.1} parent=1 // pred_fallthru
      _
    %260 = vsyncpa [#allocation3], 1
    %261 = vsyncpa [#allocation6], 1
    %262 = vsyncpa [#allocation4], 1

</llo_original>
